<compile_context>
chip_gen: v7x
topology: tpu7x:2x2x1
jax: 0.10.0
libtpu: 0.0.40
codegen_flags: <defaults>
</compile_context>

<pallas_src>
import functools
import math

import jax
import jax.numpy as jnp
from jax.experimental import pallas as pl
from jax.experimental.pallas import tpu as pltpu


def _round_up(a, b):
    return ((a + b - 1) // b) * b


def _gelu_exact(x):
    # exact erf-based GELU, matching torch.nn.GELU() default
    # TODO(synk): swap to tanh-approx GELU (EUP path) if accuracy contract allows.
    return 0.5 * x * (1.0 + jax.lax.erf(x * (1.0 / math.sqrt(2.0))))


def _glu_kernel(x_ref, w_ref, b_ref, o_ref, acc_ref, *, tn):
    k = pl.program_id(2)

    @pl.when(k == 0)
    def _():
        acc_ref[...] = jnp.zeros_like(acc_ref)

    # Single fused MXU dot against the interleaved [W1_blk | W2_blk] panel.
    acc_ref[...] += jnp.dot(
        x_ref[...], w_ref[...], preferred_element_type=jnp.float32
    )

    @pl.when(k == pl.num_programs(2) - 1)
    def _():
        y = acc_ref[...] + b_ref[...].astype(jnp.float32)   # (tm, 2*tn)
        y1 = y[:, :tn]                                       # W1 half
        y2 = y[:, tn:]                                       # W2 half
        o_ref[...] = (_gelu_exact(y1) * y2).astype(o_ref.dtype)


def linear_glu(x, w1, b1, w2, b2, *, tm=256, tn=256, tk=512):
    """Pallas implementation of GELU(x @ w1 + b1) * (x @ w2 + b2).

    x: (M, K)   w1, w2: (K, N)   b1, b2: (N,)
    """
    M, K = x.shape
    Kw, N = w1.shape
    assert K == Kw and w2.shape == (K, N)
    assert b1.shape == (N,) and b2.shape == (N,)

    itemsize = jnp.dtype(x.dtype).itemsize

    # Clamp tile sizes for small problems while keeping (8, 128) alignment.
    tm = min(tm, _round_up(M, 8))
    tn = min(tn, _round_up(N, 128))
    tk = min(tk, _round_up(K, 128))

    M_pad = _round_up(M, tm)
    N_pad = _round_up(N, tn)
    K_pad = _round_up(K, tk)

    # Zero-padding is exact: padded K rows/cols contribute nothing, padded
    # M rows / N cols are sliced off at the end.
    x_p = jnp.pad(x, ((0, M_pad - M), (0, K_pad - K)))
    w1_p = jnp.pad(w1, ((0, K_pad - K), (0, N_pad - N)))
    w2_p = jnp.pad(w2, ((0, K_pad - K), (0, N_pad - N)))
    b1_p = jnp.pad(b1, (0, N_pad - N))
    b2_p = jnp.pad(b2, (0, N_pad - N))

    nb_n = N_pad // tn
    # Interleave per-N-block: block j of width 2*tn is [w1_blk_j | w2_blk_j],
    # so one BlockSpec tile feeds a single fused dot per grid step.
    w_cat = jnp.concatenate(
        [w1_p.reshape(K_pad, nb_n, tn), w2_p.reshape(K_pad, nb_n, tn)], axis=2
    ).reshape(K_pad, 2 * N_pad)
    b_cat = jnp.concatenate(
        [b1_p.reshape(nb_n, tn), b2_p.reshape(nb_n, tn)], axis=1
    ).reshape(1, 2 * N_pad)

    grid = (M_pad // tm, nb_n, K_pad // tk)

    # VMEM budget: double-buffered input/output tiles + f32 accumulator.
    vmem_bytes = (
        2 * (tm * tk + tk * 2 * tn + 2 * tn + tm * tn) * itemsize
        + tm * 2 * tn * 4
    )
    vmem_limit = int(min(max(2 * vmem_bytes, 32 * 1024 * 1024),
                         64 * 1024 * 1024))  # stay inside v7x's 64 MiB/TC

    cost = pl.CostEstimate(
        flops=4 * M_pad * N_pad * K_pad,             # two fused matmuls
        transcendentals=M_pad * N_pad,               # one erf per output elem
        bytes_accessed=(x_p.size + w_cat.size + b_cat.size) * itemsize
        + M_pad * N_pad * itemsize,
    )

    out = pl.pallas_call(
        functools.partial(_glu_kernel, tn=tn),
        out_shape=jax.ShapeDtypeStruct((M_pad, N_pad), x.dtype),
        grid_spec=pltpu.PrefetchScalarGridSpec(
            num_scalar_prefetch=0,
            grid=grid,
            in_specs=[
                pl.BlockSpec((tm, tk), lambda i, j, k: (i, k)),       # x tile
                pl.BlockSpec((tk, 2 * tn), lambda i, j, k: (k, j)),   # [W1|W2] tile
                pl.BlockSpec((1, 2 * tn), lambda i, j, k: (0, j)),    # [b1|b2] tile
            ],
            out_specs=pl.BlockSpec((tm, tn), lambda i, j, k: (i, j)),
            scratch_shapes=[pltpu.VMEM((tm, 2 * tn), jnp.float32)],
        ),
        compiler_params=pltpu.CompilerParams(
            dimension_semantics=("parallel", "parallel", "arbitrary"),
            vmem_limit_bytes=vmem_limit,
        ),
        cost_estimate=cost,
    )(x_p, w_cat, b_cat)

    if M_pad != M or N_pad != N:
        out = out[:M, :N]
    return out


def reference(x, w1, b1, w2, b2):
    y1 = jax.nn.gelu(x @ w1 + b1, approximate=False)
    y2 = x @ w2 + b2
    return y1 * y2


def _make_inputs(key, M, K, N, dtype=jnp.float32):
    k_x, k_w1, k_b1, k_w2, k_b2 = jax.random.split(key, 5)
    x = jax.random.normal(k_x, (M, K), dtype=dtype)
    bound = 1.0 / math.sqrt(K)   # nn.Linear default init range
    w1 = jax.random.uniform(k_w1, (K, N), minval=-bound, maxval=bound, dtype=dtype)
    b1 = jax.random.uniform(k_b1, (N,), minval=-bound, maxval=bound, dtype=dtype)
    w2 = jax.random.uniform(k_w2, (K, N), minval=-bound, maxval=bound, dtype=dtype)
    b2 = jax.random.uniform(k_b2, (N,), minval=-bound, maxval=bound, dtype=dtype)
    return x, w1, b1, w2, b2


if __name__ == "__main__":
    key = jax.random.PRNGKey(0)
    k1, k2 = jax.random.split(key)

    # Small shape consistent with the module: batch_tokens=16, in=32, out=32.
    x, w1, b1, w2, b2 = _make_inputs(k1, M=16, K=32, N=32)
    out = jax.block_until_ready(linear_glu(x, w1, b1, w2, b2))
    ref = reference(x, w1, b1, w2, b2)
    assert out.shape == ref.shape
    assert jnp.allclose(out, ref, atol=1e-4, rtol=1e-4)

    # Second (still small) ragged shape that exercises multi-block M/N,
    # K-accumulation across grid steps, and edge padding.
    x, w1, b1, w2, b2 = _make_inputs(k2, M=200, K=320, N=192)
    out = jax.block_until_ready(
        linear_glu(x, w1, b1, w2, b2, tm=128, tn=128, tk=128)
    )
    ref = reference(x, w1, b1, w2, b2)
    assert out.shape == ref.shape
    assert jnp.allclose(out, ref, atol=1e-4, rtol=1e-4)

    print("KERNEL_OK")
</pallas_src>

<mosaic_0001>
module attributes {stable_mosaic.version = 11 : i64} {
  func.func @_glu_kernel(%arg0: i32, %arg1: i32, %arg2: i32, %arg3: memref<16x128xf32, #tpu.memory_space<vmem>>, %arg4: memref<128x256xf32, #tpu.memory_space<vmem>>, %arg5: memref<1x256xf32, #tpu.memory_space<vmem>>, %arg6: memref<16x128xf32, #tpu.memory_space<vmem>>, %arg7: memref<16x256xf32, #tpu.memory_space<vmem>>) attributes {dimension_semantics = [#tpu.dimension_semantics<parallel>, #tpu.dimension_semantics<parallel>, #tpu.dimension_semantics<arbitrary>], iteration_bounds = array<i64: 1, 1, 1>, scalar_prefetch = 0 : i64, scratch_operands = 1 : i64, tpu.core_type = #tpu.core_type<tc>, window_params = [{transform_indices = @transform_0, window_bounds = array<i64: 16, 128>}, {transform_indices = @transform_1, window_bounds = array<i64: 128, 256>}, {transform_indices = @transform_2, window_bounds = array<i64: 1, 256>}, {transform_indices = @transform_3, window_bounds = array<i64: 16, 128>}]} {
    %c0_i32 = arith.constant 0 : i32
    %0 = arith.cmpi eq, %arg2, %c0_i32 : i32
    %1 = arith.extui %0 : i1 to i32
    %c0_i32_0 = arith.constant 0 : i32
    %2 = arith.cmpi ne, %1, %c0_i32_0 : i32
    scf.if %2 {
      %cst_10 = arith.constant 0.000000e+00 : f32
      %12 = vector.broadcast %cst_10 : f32 to vector<16x256xf32>
      %c0_11 = arith.constant 0 : index
      %c0_12 = arith.constant 0 : index
      %13 = vector.load %arg7[%c0_11, %c0_12] : memref<16x256xf32, #tpu.memory_space<vmem>>, vector<16x256xf32>
      tpu.vector_store %arg7[%c0_11, %c0_12], %12 {strides = array<i32>} : memref<16x256xf32, #tpu.memory_space<vmem>>, vector<16x256xf32>,
    } else {
    }
    %c0 = arith.constant 0 : index
    %c0_1 = arith.constant 0 : index
    %3 = vector.load %arg7[%c0, %c0_1] : memref<16x256xf32, #tpu.memory_space<vmem>>, vector<16x256xf32>
    %c0_2 = arith.constant 0 : index
    %c0_3 = arith.constant 0 : index
    %4 = vector.load %arg3[%c0_2, %c0_3] : memref<16x128xf32, #tpu.memory_space<vmem>>, vector<16x128xf32>
    %c0_4 = arith.constant 0 : index
    %c0_5 = arith.constant 0 : index
    %5 = vector.load %arg4[%c0_4, %c0_5] : memref<128x256xf32, #tpu.memory_space<vmem>>, vector<128x256xf32>
    %cst = arith.constant dense<0.000000e+00> : vector<16x256xf32>
    %6 = tpu.matmul %4, %5, %cst {dimension_numbers = #tpu.dot_dimension_numbers<[1], [0], [0], [1], [0, 0, 1, 1], [], []>} : vector<16x128xf32>, vector<128x256xf32>, vector<16x256xf32> -> vector<16x256xf32>
    %7 = arith.addf %3, %6 : vector<16x256xf32>
    %c0_6 = arith.constant 0 : index
    %c0_7 = arith.constant 0 : index
    %8 = vector.load %arg7[%c0_6, %c0_7] : memref<16x256xf32, #tpu.memory_space<vmem>>, vector<16x256xf32>
    tpu.vector_store %arg7[%c0_6, %c0_7], %7 {strides = array<i32>} : memref<16x256xf32, #tpu.memory_space<vmem>>, vector<16x256xf32>,
    %c0_i32_8 = arith.constant 0 : i32
    %9 = arith.cmpi eq, %arg2, %c0_i32_8 : i32
    %10 = arith.extui %9 : i1 to i32
    %c0_i32_9 = arith.constant 0 : i32
    %11 = arith.cmpi ne, %10, %c0_i32_9 : i32
    scf.if %11 {
      %c0_10 = arith.constant 0 : index
      %c0_11 = arith.constant 0 : index
      %12 = vector.load %arg7[%c0_10, %c0_11] : memref<16x256xf32, #tpu.memory_space<vmem>>, vector<16x256xf32>
      %c0_12 = arith.constant 0 : index
      %c0_13 = arith.constant 0 : index
      %13 = vector.load %arg5[%c0_12, %c0_13] : memref<1x256xf32, #tpu.memory_space<vmem>>, vector<1x256xf32>
      %14 = vector.broadcast %13 : vector<1x256xf32> to vector<16x256xf32>
      %15 = arith.addf %12, %14 : vector<16x256xf32>
      %16 = vector.extract_strided_slice %15 {offsets = [0, 0], sizes = [16, 128], strides = [1, 1]} : vector<16x256xf32> to vector<16x128xf32>
      %17 = vector.extract_strided_slice %15 {offsets = [0, 128], sizes = [16, 128], strides = [1, 1]} : vector<16x256xf32> to vector<16x128xf32>
      %cst_14 = arith.constant 5.000000e-01 : f32
      %18 = vector.broadcast %cst_14 : f32 to vector<16x128xf32>
      %19 = arith.mulf %18, %16 : vector<16x128xf32>
      %cst_15 = arith.constant 0.707106769 : f32
      %20 = vector.broadcast %cst_15 : f32 to vector<16x128xf32>
      %21 = arith.mulf %16, %20 : vector<16x128xf32>
      %22 = math.erf %21 : vector<16x128xf32>
      %cst_16 = arith.constant 1.000000e+00 : f32
      %23 = vector.broadcast %cst_16 : f32 to vector<16x128xf32>
      %24 = arith.addf %23, %22 : vector<16x128xf32>
      %25 = arith.mulf %19, %24 : vector<16x128xf32>
      %26 = arith.mulf %25, %17 : vector<16x128xf32>
      %c0_17 = arith.constant 0 : index
      %c0_18 = arith.constant 0 : index
      %27 = vector.load %arg6[%c0_17, %c0_18] : memref<16x128xf32, #tpu.memory_space<vmem>>, vector<16x128xf32>
      tpu.vector_store %arg6[%c0_17, %c0_18], %26 {strides = array<i32>} : memref<16x128xf32, #tpu.memory_space<vmem>>, vector<16x128xf32>,
    } else {
    }
    return
  }
  func.func @transform_0(%arg0: i32, %arg1: i32, %arg2: i32) -> (i32, i32) {
    %c0_i32 = arith.constant 0 : i32
    return %arg0, %arg2 : i32, i32
  }
  func.func @transform_1(%arg0: i32, %arg1: i32, %arg2: i32) -> (i32, i32) {
    %c0_i32 = arith.constant 0 : i32
    return %arg2, %arg1 : i32, i32
  }
  func.func @transform_2(%arg0: i32, %arg1: i32, %arg2: i32) -> (i32, i32) {
    %c0_i32 = arith.constant 0 : i32
    %c0_i32_0 = arith.constant 0 : i32
    return %c0_i32, %arg1 : i32, i32
  }
  func.func @transform_3(%arg0: i32, %arg1: i32, %arg2: i32) -> (i32, i32) {
    %c0_i32 = arith.constant 0 : i32
    return %arg0, %arg1 : i32, i32
  }
}

</mosaic_0001>

<llo_original>
// kernel: tpu_custom_call.1
$region0: #{tpu_custom_call.1}
  #allocation0 [shape = 'u32[]', space=smem, size = 0x4, offset = 0x4, fixed_abs, tag = 'smem constant byte address 0x4 - core index']
  #allocation1 [shape = 'u32[144,128]{1,0:T(1,128)}', space=vmem, size = 0x12000, scoped, tag = 'internal scratch']
  #allocation2 [shape = 'f32[16,256]{1,0:T(8,128)}', space=vmem, size = 0x4000, scoped, tag = 'scratch operand']
  %s0 = inlined_call_operand.hbm [shape: f32[16,128], index: 0, kind: input, shape index: {}]
  %s1 = inlined_call_operand.hbm [shape: f32[128,256], index: 1, kind: input, shape index: {}]
  %s2 = inlined_call_operand.vmem [shape: f32[1,256], index: 2, kind: input, shape index: {}]
  %s3 = inlined_call_operand.hbm [shape: f32[16,128], index: 3, kind: output, shape index: {}]
  %s4 = sld [smem:[#allocation0]]
  $region38: #{tpu_custom_call.1} parent=0
    _
  %s6 = ssub.s32 1, %s4
  %s7 = scalar_select 0, %s6, %s4
  $region1: #{tpu_custom_call.1} parent=0
    #allocation3 [shape = 'u8[8192]{0}', space=vmem, size = 0x2000, scoped, tag = 'input window, operand 0, single buffered']
    #allocation4 [shape = 's32[1]{0}', space=sflag, size = 0x4, scoped, tag = 'scoped memory for tpu_custom_call.1']
    #allocation5 [shape = 's32[1]{0}', space=sflag, size = 0x4, scoped, tag = 'scoped memory for tpu_custom_call.1']
    #allocation6 [shape = 'u8[131072]{0}', space=vmem, size = 0x20000, scoped, tag = 'input window, operand 1, single buffered']
    #allocation7 [shape = 's32[1]{0}', space=sflag, size = 0x4, scoped, tag = 'scoped memory for tpu_custom_call.1']
    #allocation8 [shape = 'u8[8192]{0}', space=vmem, size = 0x2000, scoped, tag = 'output window, operand 0, single buffered']
    %8 = vsyncpa [#allocation4], 0
    %9 = vsyncpa [#allocation7], 0
    %10 = vsyncpa [#allocation5], 0
    // Predicated region
    $region2: #{tpu_custom_call.1} parent=1 // pred_check
      _
    $region3: #{tpu_custom_call.1} parent=1 // pred_check_branch
      %12 = sbr.rel (0) target = $region5
    $region4: #{tpu_custom_call.1} parent=1 // pred_region
      %s14 = ssub.s32 256, 256
      %15 = vsyncadd [#allocation4], %s14
      %s16 = sshll.u32 [#allocation3], 4
      %s17 = int_to_ptr.vmem [resolvable:$true] %s16
      %22 = dma.hbm_to_vmem [thread:$0]  %s0, 256, %s17, [#allocation4], 128, 128, 8
    $region5: #{tpu_custom_call.1} parent=1 // pred_fallthru
      _
    // Predicated region
    $region6: #{tpu_custom_call.1} parent=1 // pred_check
      _
    $region7: #{tpu_custom_call.1} parent=1 // pred_check_branch
      %24 = sbr.rel (0) target = $region9
    $region8: #{tpu_custom_call.1} parent=1 // pred_region
      %s26 = ssub.s32 4096, 4096
      %27 = vsyncadd [#allocation7], %s26
      %s28 = sshll.u32 [#allocation6], 4
      %s29 = int_to_ptr.vmem [resolvable:$true] %s28
      %34 = dma.hbm_to_vmem [thread:$0]  %s1, 4096, %s29, [#allocation7], 256, 256, 16
    $region9: #{tpu_custom_call.1} parent=1 // pred_fallthru
      _
    // Predicated region
    $region10: #{tpu_custom_call.1} parent=1 // pred_check
      _
    $region11: #{tpu_custom_call.1} parent=1 // pred_check_branch
      %36 = sbr.rel (0) target = $region13
    $region12: #{tpu_custom_call.1} parent=1 // pred_region
      _
    $region13: #{tpu_custom_call.1} parent=1 // pred_fallthru
      _
    // Predicated region
    $region14: #{tpu_custom_call.1} parent=1 // pred_check
      _
    $region15: #{tpu_custom_call.1} parent=1 // pred_check_branch
      %38 = sbr.rel (0) target = $region17
    $region16: #{tpu_custom_call.1} parent=1 // pred_region
      %39 = dma.done [#allocation4], 256
    $region17: #{tpu_custom_call.1} parent=1 // pred_fallthru
      _
    // Predicated region
    $region18: #{tpu_custom_call.1} parent=1 // pred_check
      _
    $region19: #{tpu_custom_call.1} parent=1 // pred_check_branch
      %41 = sbr.rel (0) target = $region21
    $region20: #{tpu_custom_call.1} parent=1 // pred_region
      %42 = dma.done [#allocation7], 4096
    $region21: #{tpu_custom_call.1} parent=1 // pred_fallthru
      _
    %p43 = scmp.eq.s32.totalorder 0, 0
    // Predicated region
    $region22: #{tpu_custom_call.1} parent=1 // pred_check
      %p44 = pneg %p43
    $region23: #{tpu_custom_call.1} parent=1 // pred_check_branch
      %46 = sbr.rel (%p44) target = $region25
    $region24: #{tpu_custom_call.1} parent=1 // pred_region
      %47 = vst [vmem:[#allocation2] sm:$0xff] 0.0
      %48 = vst [vmem:[#allocation2 + $0x8] sm:$0xff] 0.0
      %49 = vst [vmem:[#allocation2 + $0x10] sm:$0xff] 0.0
      %50 = vst [vmem:[#allocation2 + $0x18] sm:$0xff] 0.0
    $region25: #{tpu_custom_call.1} parent=1 // pred_fallthru
      _
    %v51 = vld [vmem:[#allocation2] sm:$0xff]
    %v52 = vld [vmem:[#allocation2 + $0x8] sm:$0xff]
    %v53 = vld [vmem:[#allocation2 + $0x10] sm:$0xff]
    %v54 = vld [vmem:[#allocation2 + $0x18] sm:$0xff]
    %v55 = vld [vmem:[#allocation3] sm:$0xff]
    %v56 = vld [vmem:[#allocation3 + $0x8] sm:$0xff]
    %v57 = vld [vmem:[#allocation6] sm:$0xff]
    %v58 = vld [vmem:[#allocation6 + $0x8] sm:$0xff]
    %v59 = vld [vmem:[#allocation6 + $0x10] sm:$0xff]
    %v60 = vld [vmem:[#allocation6 + $0x18] sm:$0xff]
    %v61 = vld [vmem:[#allocation6 + $0x20] sm:$0xff]
    %v62 = vld [vmem:[#allocation6 + $0x28] sm:$0xff]
    %v63 = vld [vmem:[#allocation6 + $0x30] sm:$0xff]
    %v64 = vld [vmem:[#allocation6 + $0x38] sm:$0xff]
    %v65 = vld [vmem:[#allocation6 + $0x40] sm:$0xff]
    %v66 = vld [vmem:[#allocation6 + $0x48] sm:$0xff]
    %v67 = vld [vmem:[#allocation6 + $0x50] sm:$0xff]
    %v68 = vld [vmem:[#allocation6 + $0x58] sm:$0xff]
    %v69 = vld [vmem:[#allocation6 + $0x60] sm:$0xff]
    %v70 = vld [vmem:[#allocation6 + $0x68] sm:$0xff]
    %v71 = vld [vmem:[#allocation6 + $0x70] sm:$0xff]
    %v72 = vld [vmem:[#allocation6 + $0x78] sm:$0xff]
    %v73 = vld [vmem:[#allocation6 + $0x80] sm:$0xff]
    %v74 = vld [vmem:[#allocation6 + $0x88] sm:$0xff]
    %v75 = vld [vmem:[#allocation6 + $0x90] sm:$0xff]
    %v76 = vld [vmem:[#allocation6 + $0x98] sm:$0xff]
    %v77 = vld [vmem:[#allocation6 + $0xa0] sm:$0xff]
    %v78 = vld [vmem:[#allocation6 + $0xa8] sm:$0xff]
    %v79 = vld [vmem:[#allocation6 + $0xb0] sm:$0xff]
    %v80 = vld [vmem:[#allocation6 + $0xb8] sm:$0xff]
    %v81 = vld [vmem:[#allocation6 + $0xc0] sm:$0xff]
    %v82 = vld [vmem:[#allocation6 + $0xc8] sm:$0xff]
    %v83 = vld [vmem:[#allocation6 + $0xd0] sm:$0xff]
    %v84 = vld [vmem:[#allocation6 + $0xd8] sm:$0xff]
    %v85 = vld [vmem:[#allocation6 + $0xe0] sm:$0xff]
    %v86 = vld [vmem:[#allocation6 + $0xe8] sm:$0xff]
    %v87 = vld [vmem:[#allocation6 + $0xf0] sm:$0xff]
    %v88 = vld [vmem:[#allocation6 + $0xf8] sm:$0xff]
    %89 = vmatprep.subr.mxu0 %v58
    %90 = vmatpush1.msra.mxu0 %v57
    %91 = vmatprep.subr.mxu0 %v60
    %92 = vmatpush1.msra.mxu0 %v59
    %93 = vmatprep.subr.mxu0 %v62
    %94 = vmatpush1.msra.mxu0 %v61
    %95 = vmatprep.subr.mxu0 %v64
    %96 = vmatpush1.msra.mxu0 %v63
    %97 = vmatprep.subr.mxu0 %v66
    %98 = vmatpush1.msra.mxu0 %v65
    %99 = vmatprep.subr.mxu0 %v68
    %100 = vmatpush1.msra.mxu0 %v67
    %101 = vmatprep.subr.mxu0 %v70
    %102 = vmatpush1.msra.mxu0 %v69
    %103 = vmatprep.subr.mxu0 %v72
    %104 = vmatpush1.msra.mxu0 %v71
    %105 = vmatprep.subr.mxu0 %v74
    %106 = vmatpush1.msra.mxu0 %v73
    %107 = vmatprep.subr.mxu0 %v76
    %108 = vmatpush1.msra.mxu0 %v75
    %109 = vmatprep.subr.mxu0 %v78
    %110 = vmatpush1.msra.mxu0 %v77
    %111 = vmatprep.subr.mxu0 %v80
    %112 = vmatpush1.msra.mxu0 %v79
    %113 = vmatprep.subr.mxu0 %v82
    %114 = vmatpush1.msra.mxu0 %v81
    %115 = vmatprep.subr.mxu0 %v84
    %116 = vmatpush1.msra.mxu0 %v83
    %117 = vmatprep.subr.mxu0 %v86
    %118 = vmatpush1.msra.mxu0 %v85
    %119 = vmatprep.subr.mxu0 %v88
    %120 = vmatpush1.msra.mxu0 %v87
    %121 = vmatprep.subr.mxu0 0.0
    %122 = vmatpush1.msra.mxu0 0.0
    %123 = vmatprep.subr.mxu0 0.0
    %124 = vmatpush1.msra.mxu0 0.0
    %125 = vmatprep.subr.mxu0 0.0
    %126 = vmatpush1.msra.mxu0 0.0
    %127 = vmatprep.subr.mxu0 0.0
    %128 = vmatpush1.msra.mxu0 0.0
    %129 = vmatprep.subr.mxu0 0.0
    %130 = vmatpush1.msra.mxu0 0.0
    %131 = vmatprep.subr.mxu0 0.0
    %132 = vmatpush1.msra.mxu0 0.0
    %133 = vmatprep.subr.mxu0 0.0
    %134 = vmatpush1.msra.mxu0 0.0
    %135 = vmatprep.subr.mxu0 0.0
    %136 = vmatpush1.msra.mxu0 0.0
    %137 = vmatprep.subr.mxu0 0.0
    %138 = vmatpush1.msra.mxu0 0.0
    %139 = vmatprep.subr.mxu0 0.0
    %140 = vmatpush1.msra.mxu0 0.0
    %141 = vmatprep.subr.mxu0 0.0
    %142 = vmatpush1.msra.mxu0 0.0
    %143 = vmatprep.subr.mxu0 0.0
    %144 = vmatpush1.msra.mxu0 0.0
    %145 = vmatprep.subr.mxu0 0.0
    %146 = vmatpush1.msra.mxu0 0.0
    %147 = vmatprep.subr.mxu0 0.0
    %148 = vmatpush1.msra.mxu0 0.0
    %149 = vmatprep.subr.mxu0 0.0
    %150 = vmatpush1.msra.mxu0 0.0
    %151 = vmatprep.subr.mxu0 0.0
    %152 = vmatpush1.msra.mxu0 0.0
    %153 = vmatprep.mubr.f32.mxu0 0.0
    %154 = vmatmul.mubr.f32.gmra.mrb[0].mxu0 %v55
    %v155 = vpop.f32.mrb[0].mxu0
    %v156 = vadd.f32 0.0, %v155
    %v157 = vpop.f32.mrb[0].mxu0
    %v158 = vadd.f32 0.0, %v157
    %159 = vmatprep.mubr.f32.mxu0 0.0
    %160 = vmatmul.mubr.f32.gmra.mrb[0].mxu0 %v56
    %v161 = vpop.f32.mrb[0].mxu0
    %v162 = vadd.f32 0.0, %v161
    %v163 = vpop.f32.mrb[0].mxu0
    %v164 = vadd.f32 0.0, %v163
    %165 = vdwg.mxu0
    %v166 = vadd.f32 %v51, %v156
    %v167 = vadd.f32 %v52, %v158
    %v168 = vadd.f32 %v53, %v162
    %v169 = vadd.f32 %v54, %v164
    %170 = vst [vmem:[#allocation2] sm:$0xff] %v166
    %171 = vst [vmem:[#allocation2 + $0x8] sm:$0xff] %v167
    %172 = vst [vmem:[#allocation2 + $0x10] sm:$0xff] %v168
    %173 = vst [vmem:[#allocation2 + $0x18] sm:$0xff] %v169
    // Predicated region
    $region26: #{tpu_custom_call.1} parent=1 // pred_check
      %p174 = pneg %p43
    $region27: #{tpu_custom_call.1} parent=1 // pred_check_branch
      %176 = sbr.rel (%p174) target = $region29
    $region28: #{tpu_custom_call.1} parent=1 // pred_region
      %v177 = vld [vmem:[#allocation2] sm:$0xff]
      %v178 = vld [vmem:[#allocation2 + $0x8] sm:$0xff]
      %v179 = vld [vmem:[#allocation2 + $0x10] sm:$0xff]
      %v180 = vld [vmem:[#allocation2 + $0x18] sm:$0xff]
      %v181 = vld [vmem:[%s2] sm:$0x3]
      %v183 = vlaneseq
      %v184 = vshrl.u32 %v183, 7
      %v185 = vsub.s32 0, %v184
      %v186 = vrot.slane %v181, %v185
      %v187 = vlaneseq
      %v188 = vshrl.u32 %v187, 7
      %v189 = vsub.s32 1, %v188
      %v190 = vrot.slane %v181, %v189
      %v193 = vadd.f32 %v177, %v186
      %v194 = vadd.f32 %v178, %v190
      %v195 = vadd.f32 %v179, %v186
      %v196 = vadd.f32 %v180, %v190
      %v197 = vmul.f32 %v193, 0.5
      %v198 = vmul.f32 %v195, 0.5
      %v199 = vmul.f32 %v193, 0.70710677
      %v200 = vmul.f32 %v195, 0.70710677
      %v201 = verf.f32.pop %v199
      %v202 = verf.f32.pop %v200
      %v203 = vadd.f32 %v201, 1.0
      %v204 = vadd.f32 %v202, 1.0
      %v205 = vmul.f32 %v197, %v203
      %v206 = vmul.f32 %v198, %v204
      %v207 = vmul.f32 %v205, %v194
      %v208 = vmul.f32 %v206, %v196
      %209 = vst [vmem:[#allocation8] sm:$0xff] %v207
      %210 = vst [vmem:[#allocation8 + $0x8] sm:$0xff] %v208
    $region29: #{tpu_custom_call.1} parent=1 // pred_fallthru
      _
    // Predicated region
    $region30: #{tpu_custom_call.1} parent=1 // pred_check
      _
    $region31: #{tpu_custom_call.1} parent=1 // pred_check_branch
      %212 = sbr.rel (0) target = $region33
    $region32: #{tpu_custom_call.1} parent=1 // pred_region
      %s214 = ssub.s32 256, 256
      %215 = vsyncadd [#allocation5], %s214
      %s216 = sshll.u32 [#allocation8], 4
      %s217 = int_to_ptr.vmem [resolvable:$true] %s216
      %222 = dma.vmem_to_hbm [thread:$0]  %s217, 256, %s3, [#allocation5], 128, 128, 8
    $region33: #{tpu_custom_call.1} parent=1 // pred_fallthru
      _
    // Predicated region
    $region34: #{tpu_custom_call.1} parent=1 // pred_check
      _
    $region35: #{tpu_custom_call.1} parent=1 // pred_check_branch
      %224 = sbr.rel (0) target = $region37
    $region36: #{tpu_custom_call.1} parent=1 // pred_region
      %225 = dma.done [#allocation5], 256
    $region37: #{tpu_custom_call.1} parent=1 // pred_fallthru
      _
    %226 = vsyncpa [#allocation4], 1
    %227 = vsyncpa [#allocation7], 1
    %228 = vsyncpa [#allocation5], 1

</llo_original>
